<compile_context>
chip_gen: v5e
topology: v5e:2x2
jax: 0.10.0
libtpu: 0.0.40
codegen_flags: <defaults>
</compile_context>

<pallas_src>
import functools

import jax
import jax.numpy as jnp
from jax import lax
from jax.experimental import pallas as pl
from jax.experimental.pallas import tpu as pltpu


def _round_up(x, m):
    return (x + m - 1) // m * m


_NEG_BIG = -1e30  # finite "-inf" used on the final layer's padded output lanes


# --------------------------------------------------------------------------------
# Kernel: the whole classifier stack, unrolled at trace time.
# --------------------------------------------------------------------------------
def _make_dc_kernel(num_linear_layers, loss_type):
    lt = loss_type.lower()

    def kernel(x_ref, *refs):
        o_ref = refs[-1]
        params = refs[:-1]  # (w0, b0, w1, b1, ..., wF, bF) — padded, lane-dense

        h = x_ref[...]
        for li in range(num_linear_layers):
            w = params[2 * li][...]        # (out_p, in_p) — PyTorch layout, no transpose
            b = params[2 * li + 1][...]    # (1, out_p)
            # h @ w.T on the MXU: contract dim 1 of h with dim 1 of w, f32 accumulate.
            s = lax.dot_general(
                h.astype(w.dtype), w,
                dimension_numbers=(((1,), (1,)), ((), ())),
                preferred_element_type=jnp.float32,
            )
            s = s + b.astype(jnp.float32)
            if li < num_linear_layers - 1:
                h = jnp.maximum(s, 0.0)    # hidden layer epilogue: ReLU (VPU)
            else:
                h = s                      # final layer: raw scores
        scores = h

        if lt in ("gr", "bs"):
            # LogSoftmax; padded lanes carry a -1e30 bias -> exp underflows to 0.
            m = jnp.max(scores, axis=-1, keepdims=True)
            z = scores - m
            lse = jnp.log(jnp.sum(jnp.exp(z), axis=-1, keepdims=True))
            scores = z - lse
        elif lt == "l2":
            # relu + row-normalize; padded lanes relu(-1e30) -> 0, don't affect the sum.
            scores = jnp.maximum(scores, 0.0)
            scores = scores / jnp.sum(scores, axis=1, keepdims=True)

        o_ref[...] = scores.astype(o_ref.dtype)

    return kernel


# --------------------------------------------------------------------------------
# One-time parameter packing (NOT per forward call): lane-dense padding to 128.
# --------------------------------------------------------------------------------
def prepare_params(weights, biases, *, param_dtype=jnp.float32):
    """Pad every Linear to 128-multiples, keeping the PyTorch (out, in) layout.

    Hidden layers: zero padding (neutral through ReLU + next matmul).
    Final layer:   bias padded with -1e30 (neutral through LogSoftmax / L2-normalize).
    """
    packed = []
    n = len(weights)
    for i, (w, b) in enumerate(zip(weights, biases)):
        out_f, in_f = w.shape
        out_p, in_p = _round_up(out_f, 128), _round_up(in_f, 128)
        w_p = jnp.zeros((out_p, in_p), param_dtype).at[:out_f, :in_f].set(
            w.astype(param_dtype))
        pad_val = 0.0 if i < n - 1 else _NEG_BIG
        b_p = jnp.full((1, out_p), pad_val, param_dtype).at[0, :out_f].set(
            b.astype(param_dtype))
        packed.append((w_p, b_p))
    return packed


# --------------------------------------------------------------------------------
# Wrapper: single fused pallas_call, batch tiled on a "parallel" grid axis.
# --------------------------------------------------------------------------------
def domain_classifier_forward(x, packed_params, *, loss_type, num_domains,
                              block_b=256):
    B, in_size = x.shape
    in_p = packed_params[0][0].shape[1]
    nd_p = packed_params[-1][0].shape[0]
    n_lin = len(packed_params)

    # Batch tile: whole batch if small; otherwise 8-aligned tiles.
    tm = B if B <= block_b else block_b
    b_pad = _round_up(B, tm)

    # Glue: zero-pad x to (b_pad, in_p).  A no-op when B % tm == 0 and
    # input_size % 128 == 0 (the production case).
    x_p = x
    if (b_pad, in_p) != (B, in_size):
        x_p = jnp.zeros((b_pad, in_p), x.dtype).at[:B, :in_size].set(x)

    grid = (b_pad // tm,)

    in_specs = [pl.BlockSpec((tm, in_p), lambda i: (i, 0))]
    flat_params = []
    for (w_p, b_p) in packed_params:
        in_specs.append(pl.BlockSpec(w_p.shape, lambda i: (0, 0)))   # resident block
        in_specs.append(pl.BlockSpec(b_p.shape, lambda i: (0, 0)))
        flat_params += [w_p, b_p]
    out_specs = pl.BlockSpec((tm, nd_p), lambda i: (i, 0))

    # Advisory cost estimate so XLA schedules neighbouring ops around the custom call.
    flops = 0
    bytes_accessed = x_p.size * x_p.dtype.itemsize
    for (w_p, b_p) in packed_params:
        flops += 2 * b_pad * w_p.shape[0] * w_p.shape[1]
        bytes_accessed += (w_p.size * w_p.dtype.itemsize
                           + b_p.size * b_p.dtype.itemsize)
    bytes_accessed += b_pad * nd_p * 4
    transcendentals = b_pad * nd_p if loss_type.lower() in ("gr", "bs") else 0

    out_padded = pl.pallas_call(
        _make_dc_kernel(n_lin, loss_type),
        out_shape=jax.ShapeDtypeStruct((b_pad, nd_p), jnp.float32),
        grid_spec=pltpu.PrefetchScalarGridSpec(
            num_scalar_prefetch=0,
            grid=grid,
            in_specs=in_specs,
            out_specs=out_specs,
        ),
        compiler_params=pltpu.CompilerParams(
            dimension_semantics=("parallel",)),
        cost_estimate=pl.CostEstimate(
            flops=flops,
            transcendentals=transcendentals,
            bytes_accessed=bytes_accessed),
    )(x_p, *flat_params)

    return out_padded[:B, :num_domains]


# --------------------------------------------------------------------------------
# Parameter init mimicking nn.Linear (uniform(-1/sqrt(fan_in), 1/sqrt(fan_in))).
# --------------------------------------------------------------------------------
def init_domain_classifier_params(key, num_layers, input_size, hidden_size,
                                  num_domains):
    dims = []
    if num_layers == 0:
        dims.append((input_size, num_domains))
    else:
        dims.append((input_size, hidden_size))
        for _ in range(num_layers - 1):
            dims.append((hidden_size, hidden_size))
        dims.append((hidden_size, num_domains))
    weights, biases = [], []
    for (fan_in, fan_out) in dims:
        key, kw, kb = jax.random.split(key, 3)
        bound = 1.0 / (fan_in ** 0.5)
        weights.append(jax.random.uniform(
            kw, (fan_out, fan_in), minval=-bound, maxval=bound, dtype=jnp.float32))
        biases.append(jax.random.uniform(
            kb, (fan_out,), minval=-bound, maxval=bound, dtype=jnp.float32))
    return weights, biases


if __name__ == "__main__":
    NUM_LAYERS, INPUT_SIZE, HIDDEN_SIZE, NUM_DOMAINS, B = 2, 32, 32, 4, 8

    key = jax.random.PRNGKey(0)
    key, kx = jax.random.split(key)
    x = jax.random.normal(kx, (B, INPUT_SIZE), dtype=jnp.float32)
    weights, biases = init_domain_classifier_params(
        key, NUM_LAYERS, INPUT_SIZE, HIDDEN_SIZE, NUM_DOMAINS)

    def reference(x, Ws, bs, loss_type):
        h = x
        for W, b in zip(Ws[:-1], bs[:-1]):
            h = jnp.maximum(h @ W.T + b, 0.0)
        s = h @ Ws[-1].T + bs[-1]
        lt = loss_type.lower()
        if lt in ("gr", "bs"):
            m = jnp.max(s, axis=-1, keepdims=True)
            s = (s - m) - jnp.log(jnp.sum(jnp.exp(s - m), axis=-1, keepdims=True))
        elif lt == "l2":
            s = jnp.maximum(s, 0.0)
            s = s / jnp.sum(s, axis=1, keepdims=True)
        return s

    # --- f32 params, 'gr' (LogSoftmax) path --------------------------------
    params_f32 = prepare_params(weights, biases, param_dtype=jnp.float32)
    out_gr = jax.block_until_ready(domain_classifier_forward(
        x, params_f32, loss_type="gr", num_domains=NUM_DOMAINS))
    assert out_gr.shape == (B, NUM_DOMAINS)
    assert jnp.allclose(out_gr, reference(x, weights, biases, "gr"),
                        atol=1e-4), "mismatch vs reference (gr)"

    # --- f32 params, 'l2' (ReLU + row-normalize) path ----------------------
    out_l2 = jax.block_until_ready(domain_classifier_forward(
        x, params_f32, loss_type="l2", num_domains=NUM_DOMAINS))
    assert jnp.allclose(out_l2, reference(x, weights, biases, "l2"),
                        atol=1e-4, equal_nan=True), "mismatch vs reference (l2)"

    # --- bf16 params (f32 accumulation), 'gr' path (v6e/v7x-friendly) ------
    params_bf16 = prepare_params(weights, biases, param_dtype=jnp.bfloat16)
    out_bf = jax.block_until_ready(domain_classifier_forward(
        x, params_bf16, loss_type="gr", num_domains=NUM_DOMAINS))
    assert jnp.allclose(out_bf, reference(x, weights, biases, "gr"),
                        atol=0.1), "mismatch vs reference (gr, bf16)"

    print("KERNEL_OK")
</pallas_src>

<mosaic_0001>
module attributes {stable_mosaic.version = 11 : i64} {
  func.func @kernel(%arg0: i32, %arg1: memref<8x128xf32, #tpu.memory_space<vmem>>, %arg2: memref<128x128xf32, #tpu.memory_space<vmem>>, %arg3: memref<1x128xf32, #tpu.memory_space<vmem>>, %arg4: memref<128x128xf32, #tpu.memory_space<vmem>>, %arg5: memref<1x128xf32, #tpu.memory_space<vmem>>, %arg6: memref<128x128xf32, #tpu.memory_space<vmem>>, %arg7: memref<1x128xf32, #tpu.memory_space<vmem>>, %arg8: memref<8x128xf32, #tpu.memory_space<vmem>>) attributes {dimension_semantics = [#tpu.dimension_semantics<parallel>], iteration_bounds = array<i64: 1>, scalar_prefetch = 0 : i64, scratch_operands = 0 : i64, tpu.core_type = #tpu.core_type<tc>, window_params = [{transform_indices = @transform_0, window_bounds = array<i64: 8, 128>}, {pipeline_mode = #tpu.pipeline_mode<synchronous>, transform_indices = @transform_1, window_bounds = array<i64: 128, 128>}, {pipeline_mode = #tpu.pipeline_mode<synchronous>, transform_indices = @transform_2, window_bounds = array<i64: 1, 128>}, {pipeline_mode = #tpu.pipeline_mode<synchronous>, transform_indices = @transform_3, window_bounds = array<i64: 128, 128>}, {pipeline_mode = #tpu.pipeline_mode<synchronous>, transform_indices = @transform_4, window_bounds = array<i64: 1, 128>}, {pipeline_mode = #tpu.pipeline_mode<synchronous>, transform_indices = @transform_5, window_bounds = array<i64: 128, 128>}, {pipeline_mode = #tpu.pipeline_mode<synchronous>, transform_indices = @transform_6, window_bounds = array<i64: 1, 128>}, {transform_indices = @transform_7, window_bounds = array<i64: 8, 128>}]} {
    %c0 = arith.constant 0 : index
    %c0_0 = arith.constant 0 : index
    %0 = vector.load %arg1[%c0, %c0_0] : memref<8x128xf32, #tpu.memory_space<vmem>>, vector<8x128xf32>
    %c0_1 = arith.constant 0 : index
    %c0_2 = arith.constant 0 : index
    %1 = vector.load %arg2[%c0_1, %c0_2] : memref<128x128xf32, #tpu.memory_space<vmem>>, vector<128x128xf32>
    %c0_3 = arith.constant 0 : index
    %c0_4 = arith.constant 0 : index
    %2 = vector.load %arg3[%c0_3, %c0_4] : memref<1x128xf32, #tpu.memory_space<vmem>>, vector<1x128xf32>
    %cst = arith.constant dense<0.000000e+00> : vector<8x128xf32>
    %3 = tpu.matmul %0, %1, %cst {dimension_numbers = #tpu.dot_dimension_numbers<[1], [1], [0], [0], [0, 0, 1, 0], [], []>} : vector<8x128xf32>, vector<128x128xf32>, vector<8x128xf32> -> vector<8x128xf32>
    %4 = vector.broadcast %2 : vector<1x128xf32> to vector<8x128xf32>
    %5 = arith.addf %3, %4 : vector<8x128xf32>
    %cst_5 = arith.constant 0.000000e+00 : f32
    %6 = vector.broadcast %cst_5 : f32 to vector<8x128xf32>
    %7 = arith.maximumf %5, %6 : vector<8x128xf32>
    %c0_6 = arith.constant 0 : index
    %c0_7 = arith.constant 0 : index
    %8 = vector.load %arg4[%c0_6, %c0_7] : memref<128x128xf32, #tpu.memory_space<vmem>>, vector<128x128xf32>
    %c0_8 = arith.constant 0 : index
    %c0_9 = arith.constant 0 : index
    %9 = vector.load %arg5[%c0_8, %c0_9] : memref<1x128xf32, #tpu.memory_space<vmem>>, vector<1x128xf32>
    %cst_10 = arith.constant dense<0.000000e+00> : vector<8x128xf32>
    %10 = tpu.matmul %7, %8, %cst_10 {dimension_numbers = #tpu.dot_dimension_numbers<[1], [1], [0], [0], [0, 0, 1, 0], [], []>} : vector<8x128xf32>, vector<128x128xf32>, vector<8x128xf32> -> vector<8x128xf32>
    %11 = vector.broadcast %9 : vector<1x128xf32> to vector<8x128xf32>
    %12 = arith.addf %10, %11 : vector<8x128xf32>
    %cst_11 = arith.constant 0.000000e+00 : f32
    %13 = vector.broadcast %cst_11 : f32 to vector<8x128xf32>
    %14 = arith.maximumf %12, %13 : vector<8x128xf32>
    %c0_12 = arith.constant 0 : index
    %c0_13 = arith.constant 0 : index
    %15 = vector.load %arg6[%c0_12, %c0_13] : memref<128x128xf32, #tpu.memory_space<vmem>>, vector<128x128xf32>
    %c0_14 = arith.constant 0 : index
    %c0_15 = arith.constant 0 : index
    %16 = vector.load %arg7[%c0_14, %c0_15] : memref<1x128xf32, #tpu.memory_space<vmem>>, vector<1x128xf32>
    %cst_16 = arith.constant dense<0.000000e+00> : vector<8x128xf32>
    %17 = tpu.matmul %14, %15, %cst_16 {dimension_numbers = #tpu.dot_dimension_numbers<[1], [1], [0], [0], [0, 0, 1, 0], [], []>} : vector<8x128xf32>, vector<128x128xf32>, vector<8x128xf32> -> vector<8x128xf32>
    %18 = vector.broadcast %16 : vector<1x128xf32> to vector<8x128xf32>
    %19 = arith.addf %17, %18 : vector<8x128xf32>
    %cst_17 = arith.constant dense<0xFF800000> : vector<8xf32>
    %20 = vector.multi_reduction <maximumf>, %19, %cst_17 [1] : vector<8x128xf32> to vector<8xf32>
    %21 = vector.shape_cast %20 : vector<8xf32> to vector<8x1xf32>
    %22 = vector.broadcast %21 : vector<8x1xf32> to vector<8x128xf32>
    %23 = arith.subf %19, %22 : vector<8x128xf32>
    %24 = math.exp %23 : vector<8x128xf32>
    %cst_18 = arith.constant dense<0.000000e+00> : vector<8xf32>
    %25 = vector.multi_reduction <add>, %24, %cst_18 [1] : vector<8x128xf32> to vector<8xf32>
    %26 = vector.shape_cast %25 : vector<8xf32> to vector<8x1xf32>
    %27 = math.log %26 : vector<8x1xf32>
    %28 = vector.broadcast %27 : vector<8x1xf32> to vector<8x128xf32>
    %29 = arith.subf %23, %28 : vector<8x128xf32>
    %c0_19 = arith.constant 0 : index
    %c0_20 = arith.constant 0 : index
    %30 = vector.load %arg8[%c0_19, %c0_20] : memref<8x128xf32, #tpu.memory_space<vmem>>, vector<8x128xf32>
    tpu.vector_store %arg8[%c0_19, %c0_20], %29 {strides = array<i32>} : memref<8x128xf32, #tpu.memory_space<vmem>>, vector<8x128xf32>,
    return
  }
  func.func @transform_0(%arg0: i32) -> (i32, i32) {
    %c0_i32 = arith.constant 0 : i32
    %c0_i32_0 = arith.constant 0 : i32
    return %arg0, %c0_i32 : i32, i32
  }
  func.func @transform_1(%arg0: i32) -> (i32, i32) {
    %c0_i32 = arith.constant 0 : i32
    %c0_i32_0 = arith.constant 0 : i32
    %c0_i32_1 = arith.constant 0 : i32
    return %c0_i32, %c0_i32_0 : i32, i32
  }
  func.func @transform_2(%arg0: i32) -> (i32, i32) {
    %c0_i32 = arith.constant 0 : i32
    %c0_i32_0 = arith.constant 0 : i32
    %c0_i32_1 = arith.constant 0 : i32
    return %c0_i32, %c0_i32_0 : i32, i32
  }
  func.func @transform_3(%arg0: i32) -> (i32, i32) {
    %c0_i32 = arith.constant 0 : i32
    %c0_i32_0 = arith.constant 0 : i32
    %c0_i32_1 = arith.constant 0 : i32
    return %c0_i32, %c0_i32_0 : i32, i32
  }
  func.func @transform_4(%arg0: i32) -> (i32, i32) {
    %c0_i32 = arith.constant 0 : i32
    %c0_i32_0 = arith.constant 0 : i32
    %c0_i32_1 = arith.constant 0 : i32
    return %c0_i32, %c0_i32_0 : i32, i32
  }
  func.func @transform_5(%arg0: i32) -> (i32, i32) {
    %c0_i32 = arith.constant 0 : i32
    %c0_i32_0 = arith.constant 0 : i32
    %c0_i32_1 = arith.constant 0 : i32
    return %c0_i32, %c0_i32_0 : i32, i32
  }
  func.func @transform_6(%arg0: i32) -> (i32, i32) {
    %c0_i32 = arith.constant 0 : i32
    %c0_i32_0 = arith.constant 0 : i32
    %c0_i32_1 = arith.constant 0 : i32
    return %c0_i32, %c0_i32_0 : i32, i32
  }
  func.func @transform_7(%arg0: i32) -> (i32, i32) {
    %c0_i32 = arith.constant 0 : i32
    %c0_i32_0 = arith.constant 0 : i32
    return %arg0, %c0_i32 : i32, i32
  }
}

</mosaic_0001>

<llo_original>
// kernel: tpu_custom_call.1
$region0: #{tpu_custom_call.1}
  #allocation0 [shape = 'u32[]', space=smem, size = 0x4, offset = 0x4, fixed_abs, tag = 'smem constant byte address 0x4 - core index']
  #allocation1 [shape = 'u32[72,128]{1,0:T(1,128)}', space=vmem, size = 0x9000, scoped, tag = 'internal scratch']
  %s0 = inlined_call_operand.hbm [shape: f32[8,128], index: 0, kind: input, shape index: {}]
  %s1 = inlined_call_operand.hbm [shape: f32[128,128], index: 1, kind: input, shape index: {}]
  %s2 = inlined_call_operand.vmem [shape: f32[1,128], index: 2, kind: input, shape index: {}]
  %s3 = inlined_call_operand.hbm [shape: f32[128,128], index: 3, kind: input, shape index: {}]
  %s4 = inlined_call_operand.vmem [shape: f32[1,128], index: 4, kind: input, shape index: {}]
  %s5 = inlined_call_operand.hbm [shape: f32[128,128], index: 5, kind: input, shape index: {}]
  %s6 = inlined_call_operand.vmem [shape: f32[1,128], index: 6, kind: input, shape index: {}]
  %s7 = inlined_call_operand.hbm [shape: f32[8,128], index: 7, kind: output, shape index: {}]
  %s8 = sld [smem:[#allocation0]]
  $region54: #{tpu_custom_call.1} parent=0
    _
  %s10 = ssub.s32 1, %s8
  %s11 = scalar_select 0, %s10, %s8
  $region1: #{tpu_custom_call.1} parent=0
    #allocation2 [shape = 'u8[4096]{0}', space=vmem, size = 0x1000, scoped, tag = 'input window, operand 0, single buffered']
    #allocation3 [shape = 's32[1]{0}', space=sflag, size = 0x4, scoped, tag = 'scoped memory for tpu_custom_call.1']
    #allocation4 [shape = 's32[1]{0}', space=sflag, size = 0x4, scoped, tag = 'scoped memory for tpu_custom_call.1']
    #allocation5 [shape = 'u8[65536]{0}', space=vmem, size = 0x10000, scoped, tag = 'input window, operand 1, single buffered']
    #allocation6 [shape = 's32[1]{0}', space=sflag, size = 0x4, scoped, tag = 'scoped memory for tpu_custom_call.1']
    #allocation7 [shape = 'u8[65536]{0}', space=vmem, size = 0x10000, scoped, tag = 'input window, operand 3, single buffered']
    #allocation8 [shape = 'u8[65536]{0}', space=vmem, size = 0x10000, scoped, tag = 'input window, operand 5, single buffered']
    #allocation9 [shape = 's32[1]{0}', space=sflag, size = 0x4, scoped, tag = 'scoped memory for tpu_custom_call.1']
    #allocation10 [shape = 'u8[4096]{0}', space=vmem, size = 0x1000, scoped, tag = 'output window, operand 0, single buffered']
    %12 = vsyncpa [#allocation3], 0
    %13 = vsyncpa [#allocation6], 0
    %14 = vsyncpa [#allocation9], 0
    %15 = vsyncpa [#allocation4], 0
    // Predicated region
    $region2: #{tpu_custom_call.1} parent=1 // pred_check
      _
    $region3: #{tpu_custom_call.1} parent=1 // pred_check_branch
      %17 = sbr.rel (0) target = $region5
    $region4: #{tpu_custom_call.1} parent=1 // pred_region
      %19 = vsyncadd [#allocation3], 0
      %s21 = sshll.u32 %s0, 4
      %s22 = int_to_ptr.hbm [resolvable:$true] %s21
      %s23 = sshll.u32 [#allocation2], 4
      %s24 = int_to_ptr.vmem [resolvable:$true] %s23
      %26 = dma.hbm_to_vmem [thread:$0]  %s22, 128, %s24, [#allocation3]
    $region5: #{tpu_custom_call.1} parent=1 // pred_fallthru
      _
    // Predicated region
    $region6: #{tpu_custom_call.1} parent=1 // pred_check
      _
    $region7: #{tpu_custom_call.1} parent=1 // pred_check_branch
      %28 = sbr.rel (0) target = $region9
    $region8: #{tpu_custom_call.1} parent=1 // pred_region
      %30 = vsyncadd [#allocation6], 0
      %s31 = sshll.u32 %s1, 4
      %s32 = int_to_ptr.hbm [resolvable:$true] %s31
      %s33 = sshll.u32 [#allocation5], 4
      %s34 = int_to_ptr.vmem [resolvable:$true] %s33
      %39 = dma.hbm_to_vmem [thread:$0]  %s32, 2048, %s34, [#allocation6], 128, 128, 8
    $region9: #{tpu_custom_call.1} parent=1 // pred_fallthru
      _
    // Predicated region
    $region10: #{tpu_custom_call.1} parent=1 // pred_check
      _
    $region11: #{tpu_custom_call.1} parent=1 // pred_check_branch
      %41 = sbr.rel (0) target = $region13
    $region12: #{tpu_custom_call.1} parent=1 // pred_region
      _
    $region13: #{tpu_custom_call.1} parent=1 // pred_fallthru
      _
    // Predicated region
    $region14: #{tpu_custom_call.1} parent=1 // pred_check
      _
    $region15: #{tpu_custom_call.1} parent=1 // pred_check_branch
      %43 = sbr.rel (0) target = $region17
    $region16: #{tpu_custom_call.1} parent=1 // pred_region
      %45 = vsyncadd [#allocation6], 0
      %s46 = sshll.u32 %s3, 4
      %s47 = int_to_ptr.hbm [resolvable:$true] %s46
      %s48 = sshll.u32 [#allocation7], 4
      %s49 = int_to_ptr.vmem [resolvable:$true] %s48
      %54 = dma.hbm_to_vmem [thread:$0]  %s47, 2048, %s49, [#allocation6], 128, 128, 8
    $region17: #{tpu_custom_call.1} parent=1 // pred_fallthru
      _
    // Predicated region
    $region18: #{tpu_custom_call.1} parent=1 // pred_check
      _
    $region19: #{tpu_custom_call.1} parent=1 // pred_check_branch
      %56 = sbr.rel (0) target = $region21
    $region20: #{tpu_custom_call.1} parent=1 // pred_region
      _
    $region21: #{tpu_custom_call.1} parent=1 // pred_fallthru
      _
    // Predicated region
    $region22: #{tpu_custom_call.1} parent=1 // pred_check
      _
    $region23: #{tpu_custom_call.1} parent=1 // pred_check_branch
      %58 = sbr.rel (0) target = $region25
    $region24: #{tpu_custom_call.1} parent=1 // pred_region
      %60 = vsyncadd [#allocation9], 0
      %s61 = sshll.u32 %s5, 4
      %s62 = int_to_ptr.hbm [resolvable:$true] %s61
      %s63 = sshll.u32 [#allocation8], 4
      %s64 = int_to_ptr.vmem [resolvable:$true] %s63
      %69 = dma.hbm_to_vmem [thread:$0]  %s62, 2048, %s64, [#allocation9], 128, 128, 8
    $region25: #{tpu_custom_call.1} parent=1 // pred_fallthru
      _
    // Predicated region
    $region26: #{tpu_custom_call.1} parent=1 // pred_check
      _
    $region27: #{tpu_custom_call.1} parent=1 // pred_check_branch
      %71 = sbr.rel (0) target = $region29
    $region28: #{tpu_custom_call.1} parent=1 // pred_region
      _
    $region29: #{tpu_custom_call.1} parent=1 // pred_fallthru
      _
    // Predicated region
    $region30: #{tpu_custom_call.1} parent=1 // pred_check
      _
    $region31: #{tpu_custom_call.1} parent=1 // pred_check_branch
      %73 = sbr.rel (0) target = $region33
    $region32: #{tpu_custom_call.1} parent=1 // pred_region
      %75 = dma.done [#allocation3], 128
    $region33: #{tpu_custom_call.1} parent=1 // pred_fallthru
      _
    // Predicated region
    $region34: #{tpu_custom_call.1} parent=1 // pred_check
      _
    $region35: #{tpu_custom_call.1} parent=1 // pred_check_branch
      %77 = sbr.rel (0) target = $region37
    $region36: #{tpu_custom_call.1} parent=1 // pred_region
      %79 = dma.done [#allocation6], 2048
    $region37: #{tpu_custom_call.1} parent=1 // pred_fallthru
      _
    // Predicated region
    $region38: #{tpu_custom_call.1} parent=1 // pred_check
      _
    $region39: #{tpu_custom_call.1} parent=1 // pred_check_branch
      %81 = sbr.rel (0) target = $region41
    $region40: #{tpu_custom_call.1} parent=1 // pred_region
      %83 = dma.done [#allocation6], 2048
    $region41: #{tpu_custom_call.1} parent=1 // pred_fallthru
      _
    // Predicated region
    $region42: #{tpu_custom_call.1} parent=1 // pred_check
      _
    $region43: #{tpu_custom_call.1} parent=1 // pred_check_branch
      %85 = sbr.rel (0) target = $region45
    $region44: #{tpu_custom_call.1} parent=1 // pred_region
      %87 = dma.done [#allocation9], 2048
    $region45: #{tpu_custom_call.1} parent=1 // pred_fallthru
      _
    %v88 = vld [vmem:[#allocation2] sm:$0xff]
    %v89 = vld [vmem:[#allocation5] sm:$0xff]
    %v90 = vld [vmem:[#allocation5 + $0x8] sm:$0xff]
    %v91 = vld [vmem:[#allocation5 + $0x10] sm:$0xff]
    %v92 = vld [vmem:[#allocation5 + $0x18] sm:$0xff]
    %v93 = vld [vmem:[#allocation5 + $0x20] sm:$0xff]
    %v94 = vld [vmem:[#allocation5 + $0x28] sm:$0xff]
    %v95 = vld [vmem:[#allocation5 + $0x30] sm:$0xff]
    %v96 = vld [vmem:[#allocation5 + $0x38] sm:$0xff]
    %v97 = vld [vmem:[#allocation5 + $0x40] sm:$0xff]
    %v98 = vld [vmem:[#allocation5 + $0x48] sm:$0xff]
    %v99 = vld [vmem:[#allocation5 + $0x50] sm:$0xff]
    %v100 = vld [vmem:[#allocation5 + $0x58] sm:$0xff]
    %v101 = vld [vmem:[#allocation5 + $0x60] sm:$0xff]
    %v102 = vld [vmem:[#allocation5 + $0x68] sm:$0xff]
    %v103 = vld [vmem:[#allocation5 + $0x70] sm:$0xff]
    %v104 = vld [vmem:[#allocation5 + $0x78] sm:$0xff]
    %v105 = vld [vmem:[%s2] sm:$0x1]
    %v107 = vperm.slane %v105, 0
    %109 = vmatpush.xpose.msra.mxu0 %v104
    %110 = vmatpush.xpose.msra.mxu0 %v103
    %111 = vmatpush.xpose.msra.mxu0 %v102
    %112 = vmatpush.xpose.msra.mxu0 %v101
    %113 = vmatpush.xpose.msra.mxu0 %v100
    %114 = vmatpush.xpose.msra.mxu0 %v99
    %115 = vmatpush.xpose.msra.mxu0 %v98
    %116 = vmatpush.xpose.msra.mxu0 %v97
    %117 = vmatpush.xpose.msra.mxu0 %v96
    %118 = vmatpush.xpose.msra.mxu0 %v95
    %119 = vmatpush.xpose.msra.mxu0 %v94
    %120 = vmatpush.xpose.msra.mxu0 %v93
    %121 = vmatpush.xpose.msra.mxu0 %v92
    %122 = vmatpush.xpose.msra.mxu0 %v91
    %123 = vmatpush.xpose.msra.mxu0 %v90
    %124 = vmatpush.xpose.msra.mxu0 %v89
    %125 = vmatmul.f32.gmra.mxu0 %v88
    %v126 = vpop.f32.mrf.mxu0
    %v127 = vadd.f32 %v107, %v126
    %128 = vdwg.mxu0
    %v129 = vmax.f32 %v127, 0.0
    %v130 = vld [vmem:[#allocation7] sm:$0xff]
    %v131 = vld [vmem:[#allocation7 + $0x8] sm:$0xff]
    %v132 = vld [vmem:[#allocation7 + $0x10] sm:$0xff]
    %v133 = vld [vmem:[#allocation7 + $0x18] sm:$0xff]
    %v134 = vld [vmem:[#allocation7 + $0x20] sm:$0xff]
    %v135 = vld [vmem:[#allocation7 + $0x28] sm:$0xff]
    %v136 = vld [vmem:[#allocation7 + $0x30] sm:$0xff]
    %v137 = vld [vmem:[#allocation7 + $0x38] sm:$0xff]
    %v138 = vld [vmem:[#allocation7 + $0x40] sm:$0xff]
    %v139 = vld [vmem:[#allocation7 + $0x48] sm:$0xff]
    %v140 = vld [vmem:[#allocation7 + $0x50] sm:$0xff]
    %v141 = vld [vmem:[#allocation7 + $0x58] sm:$0xff]
    %v142 = vld [vmem:[#allocation7 + $0x60] sm:$0xff]
    %v143 = vld [vmem:[#allocation7 + $0x68] sm:$0xff]
    %v144 = vld [vmem:[#allocation7 + $0x70] sm:$0xff]
    %v145 = vld [vmem:[#allocation7 + $0x78] sm:$0xff]
    %v146 = vld [vmem:[%s4] sm:$0x1]
    %v148 = vperm.slane %v146, 0
    %150 = vmatpush.xpose.msra.mxu0 %v145
    %151 = vmatpush.xpose.msra.mxu0 %v144
    %152 = vmatpush.xpose.msra.mxu0 %v143
    %153 = vmatpush.xpose.msra.mxu0 %v142
    %154 = vmatpush.xpose.msra.mxu0 %v141
    %155 = vmatpush.xpose.msra.mxu0 %v140
    %156 = vmatpush.xpose.msra.mxu0 %v139
    %157 = vmatpush.xpose.msra.mxu0 %v138
    %158 = vmatpush.xpose.msra.mxu0 %v137
    %159 = vmatpush.xpose.msra.mxu0 %v136
    %160 = vmatpush.xpose.msra.mxu0 %v135
    %161 = vmatpush.xpose.msra.mxu0 %v134
    %162 = vmatpush.xpose.msra.mxu0 %v133
    %163 = vmatpush.xpose.msra.mxu0 %v132
    %164 = vmatpush.xpose.msra.mxu0 %v131
    %165 = vmatpush.xpose.msra.mxu0 %v130
    %166 = vmatmul.f32.gmra.mxu0 %v129
    %v167 = vpop.f32.mrf.mxu0
    %v168 = vadd.f32 %v148, %v167
    %169 = vdwg.mxu0
    %v170 = vmax.f32 %v168, 0.0
    %v171 = vld [vmem:[#allocation8] sm:$0xff]
    %v172 = vld [vmem:[#allocation8 + $0x8] sm:$0xff]
    %v173 = vld [vmem:[#allocation8 + $0x10] sm:$0xff]
    %v174 = vld [vmem:[#allocation8 + $0x18] sm:$0xff]
    %v175 = vld [vmem:[#allocation8 + $0x20] sm:$0xff]
    %v176 = vld [vmem:[#allocation8 + $0x28] sm:$0xff]
    %v177 = vld [vmem:[#allocation8 + $0x30] sm:$0xff]
    %v178 = vld [vmem:[#allocation8 + $0x38] sm:$0xff]
    %v179 = vld [vmem:[#allocation8 + $0x40] sm:$0xff]
    %v180 = vld [vmem:[#allocation8 + $0x48] sm:$0xff]
    %v181 = vld [vmem:[#allocation8 + $0x50] sm:$0xff]
    %v182 = vld [vmem:[#allocation8 + $0x58] sm:$0xff]
    %v183 = vld [vmem:[#allocation8 + $0x60] sm:$0xff]
    %v184 = vld [vmem:[#allocation8 + $0x68] sm:$0xff]
    %v185 = vld [vmem:[#allocation8 + $0x70] sm:$0xff]
    %v186 = vld [vmem:[#allocation8 + $0x78] sm:$0xff]
    %v187 = vld [vmem:[%s6] sm:$0x1]
    %v189 = vperm.slane %v187, 0
    %191 = vmatpush.xpose.msra.mxu0 %v186
    %192 = vmatpush.xpose.msra.mxu0 %v185
    %193 = vmatpush.xpose.msra.mxu0 %v184
    %194 = vmatpush.xpose.msra.mxu0 %v183
    %195 = vmatpush.xpose.msra.mxu0 %v182
    %196 = vmatpush.xpose.msra.mxu0 %v181
    %197 = vmatpush.xpose.msra.mxu0 %v180
    %198 = vmatpush.xpose.msra.mxu0 %v179
    %199 = vmatpush.xpose.msra.mxu0 %v178
    %200 = vmatpush.xpose.msra.mxu0 %v177
    %201 = vmatpush.xpose.msra.mxu0 %v176
    %202 = vmatpush.xpose.msra.mxu0 %v175
    %203 = vmatpush.xpose.msra.mxu0 %v174
    %204 = vmatpush.xpose.msra.mxu0 %v173
    %205 = vmatpush.xpose.msra.mxu0 %v172
    %206 = vmatpush.xpose.msra.mxu0 %v171
    %207 = vmatmul.f32.gmra.mxu0 %v170
    %v208 = vpop.f32.mrf.mxu0
    %v209 = vadd.f32 %v189, %v208
    %210 = vdwg.mxu0
    %211 = vmax.xlane.f32.xlu0 %v209
    %v212 = vpop.xlane.xlu0 %211
    %v213 = vsub.f32 %v209, %v212
    %v214 = vmul.f32 %v213, 1.442695
    %v215 = vpow.pop %v214
    %216 = vadd.xlane.f32.xlu0 %v215
    %v217 = vpop.xlane.xlu0 %216
    %v218 = vlog2.pop %v217
    %v219 = vmul.f32 %v218, 0.6931472
    %v220 = vsub.f32 %v213, %v219
    %221 = vst [vmem:[#allocation10] sm:$0xff] %v220
    // Predicated region
    $region46: #{tpu_custom_call.1} parent=1 // pred_check
      _
    $region47: #{tpu_custom_call.1} parent=1 // pred_check_branch
      %223 = sbr.rel (0) target = $region49
    $region48: #{tpu_custom_call.1} parent=1 // pred_region
      %225 = vsyncadd [#allocation4], 0
      %s227 = sshll.u32 [#allocation10], 4
      %s228 = int_to_ptr.vmem [resolvable:$true] %s227
      %s229 = sshll.u32 %s7, 4
      %s230 = int_to_ptr.hbm [resolvable:$true] %s229
      %232 = dma.vmem_to_hbm [thread:$0]  %s228, 128, %s230, [#allocation4]
    $region49: #{tpu_custom_call.1} parent=1 // pred_fallthru
      _
    // Predicated region
    $region50: #{tpu_custom_call.1} parent=1 // pred_check
      _
    $region51: #{tpu_custom_call.1} parent=1 // pred_check_branch
      %234 = sbr.rel (0) target = $region53
    $region52: #{tpu_custom_call.1} parent=1 // pred_region
      %236 = dma.done [#allocation4], 128
    $region53: #{tpu_custom_call.1} parent=1 // pred_fallthru
      _
    %237 = vsyncpa [#allocation3], 1
    %238 = vsyncpa [#allocation6], 1
    %239 = vsyncpa [#allocation9], 1
    %240 = vsyncpa [#allocation4], 1

</llo_original>
